<compile_context>
chip_gen: v5e
topology: v5e:2x2
jax: 0.10.0
libtpu: 0.0.40
codegen_flags: <defaults>
</compile_context>

<pallas_src>
import functools

import jax
import jax.numpy as jnp
from jax.experimental import pallas as pl
from jax.experimental.pallas import tpu as pltpu

_LANE = 128          # lane width
_ACC_SUB = 8         # sublanes per vreg -> accumulator blocks are (8, 128)
_TILE_ROWS = 1024    # rows of 128 lanes streamed per grid step (512 KiB f32)


def _round_up(a, m):
    return -(-a // m) * m


def _dice_kernel(x_ref, t_ref, xt_ref, s_ref, *,
                 rows, block_rows, blocks_per_split, needs_mask):
    c = pl.program_id(0)          # split index ("parallel", v7x dual-core)
    r = pl.program_id(1)          # row-block index within split (reduction)

    @pl.when(r == 0)
    def _():
        xt_ref[...] = jnp.zeros_like(xt_ref)
        s_ref[...] = jnp.zeros_like(s_ref)

    x = x_ref[...].astype(jnp.float32)
    t = t_ref[...].astype(jnp.float32)

    if needs_mask:
        # Zero rows past the end of the (rows, 128) view.  Covers both the
        # partial last block and any clamped duplicate block of the split.
        row0 = (c * blocks_per_split + r) * block_rows
        row_idx = row0 + jax.lax.broadcasted_iota(
            jnp.int32, (block_rows, _LANE), 0)
        valid = row_idx < rows
        x = jnp.where(valid, x, 0.0)
        t = jnp.where(valid, t, 0.0)

    # Fold the big block into vreg-shaped (8, 128) partial sums so the
    # accumulators stay tiny regardless of block size.
    folds = block_rows // _ACC_SUB
    xt_ref[...] += jnp.sum((x * t).reshape(folds, _ACC_SUB, _LANE), axis=0)
    s_ref[...] += jnp.sum((x + t).reshape(folds, _ACC_SUB, _LANE), axis=0)


def dice_loss(inputs, targets, smooth=1.0):
    """Pallas implementation of DiceLoss.forward (returns a scalar)."""
    x = inputs.reshape(-1)
    t = targets.reshape(-1)
    n = x.shape[0]

    # Pad only up to the next multiple of 128 lanes (and to at least one
    # (8,128) tile for tiny inputs).  Zero padding is sum-neutral; typical
    # segmentation shapes (n % 128 == 0) hit the copy-free reshape path.
    padded_n = max(_round_up(n, _LANE), _ACC_SUB * _LANE)
    if padded_n != n:
        # TODO(synk): avoid this whole-array pad copy for n % 128 != 0 by
        # masking the ragged last row in-kernel.
        x = jnp.pad(x, (0, padded_n - n))
        t = jnp.pad(t, (0, padded_n - n))
    rows = padded_n // _LANE

    # Keep original dtype: no wrapper-side astype (kernel casts on the VPU).
    x2 = x.reshape(rows, _LANE)
    t2 = t.reshape(rows, _LANE)

    # Largest multiple-of-8 row stripe that fits the tile budget and the
    # array (never exceeds `rows`, so every block start is in bounds).
    block_rows = min(_TILE_ROWS, (rows // _ACC_SUB) * _ACC_SUB)
    n_blocks = pl.cdiv(rows, block_rows)

    # v7x has 2 TensorCores: split row-blocks across a leading "parallel"
    # axis; on single-core v5e/v6e this runs sequentially at the same cost.
    n_split = 2 if n_blocks >= 2 else 1
    bps = pl.cdiv(n_blocks, n_split)              # blocks per split
    needs_mask = (n_split * bps * block_rows) != rows
    last_block = n_blocks - 1

    def in_map(c, r):
        # Clamp so an over-allocated trailing block of a split never indexes
        # past the array; its contribution is zeroed by the in-kernel mask.
        return (jnp.minimum(c * bps + r, last_block), 0)

    kernel = functools.partial(
        _dice_kernel, rows=rows, block_rows=block_rows,
        blocks_per_split=bps, needs_mask=needs_mask)

    xt_part, s_part = pl.pallas_call(
        kernel,
        out_shape=(
            jax.ShapeDtypeStruct((n_split * _ACC_SUB, _LANE), jnp.float32),
            jax.ShapeDtypeStruct((n_split * _ACC_SUB, _LANE), jnp.float32),
        ),
        grid_spec=pltpu.PrefetchScalarGridSpec(
            num_scalar_prefetch=0,
            grid=(n_split, bps),
            in_specs=[
                pl.BlockSpec((block_rows, _LANE), in_map),
                pl.BlockSpec((block_rows, _LANE), in_map),
            ],
            out_specs=(
                pl.BlockSpec((_ACC_SUB, _LANE), lambda c, r: (c, 0)),
                pl.BlockSpec((_ACC_SUB, _LANE), lambda c, r: (c, 0)),
            ),
        ),
        compiler_params=pltpu.CompilerParams(
            dimension_semantics=("parallel", "arbitrary")),
    )(x2, t2)

    smooth = jnp.float32(smooth)
    intersection = jnp.sum(xt_part)
    total = jnp.sum(s_part)               # == inputs.sum() + targets.sum()
    dice = (2.0 * intersection + smooth) / (total + smooth)
    return 1.0 - dice


def _dice_loss_ref(inputs, targets, smooth=1.0):
    x = inputs.reshape(-1).astype(jnp.float32)
    t = targets.reshape(-1).astype(jnp.float32)
    inter = jnp.sum(x * t)
    dice = (2.0 * inter + smooth) / (jnp.sum(x) + jnp.sum(t) + smooth)
    return 1.0 - dice


if __name__ == "__main__":
    key = jax.random.PRNGKey(0)
    k1, k2 = jax.random.split(key)

    # NCHW-style segmentation probabilities (post-sigmoid) + binary mask.
    inputs = jax.nn.sigmoid(jax.random.normal(k1, (2, 4, 16, 16), jnp.float32))
    targets = (jax.random.uniform(k2, (2, 4, 16, 16)) > 0.5).astype(jnp.float32)

    loss = dice_loss(inputs, targets, smooth=1.0)
    loss = jax.block_until_ready(loss)

    ref = _dice_loss_ref(inputs, targets, smooth=1.0)
    assert jnp.allclose(loss, ref, atol=1e-5, rtol=1e-5), (loss, ref)

    print("KERNEL_OK")
</pallas_src>

<mosaic_0001>
module attributes {stable_mosaic.version = 11 : i64} {
  func.func @_dice_kernel(%arg0: i32, %arg1: i32, %arg2: memref<16x128xf32, #tpu.memory_space<vmem>>, %arg3: memref<16x128xf32, #tpu.memory_space<vmem>>, %arg4: memref<8x128xf32, #tpu.memory_space<vmem>>, %arg5: memref<8x128xf32, #tpu.memory_space<vmem>>) attributes {dimension_semantics = [#tpu.dimension_semantics<parallel>, #tpu.dimension_semantics<arbitrary>], iteration_bounds = array<i64: 1, 1>, scalar_prefetch = 0 : i64, scratch_operands = 0 : i64, tpu.core_type = #tpu.core_type<tc>, window_params = [{transform_indices = @transform_0, window_bounds = array<i64: 16, 128>}, {transform_indices = @transform_1, window_bounds = array<i64: 16, 128>}, {transform_indices = @transform_2, window_bounds = array<i64: 8, 128>}, {transform_indices = @transform_3, window_bounds = array<i64: 8, 128>}]} {
    %c0_i32 = arith.constant 0 : i32
    %0 = arith.cmpi eq, %arg1, %c0_i32 : i32
    %1 = arith.extui %0 : i1 to i32
    %c0_i32_0 = arith.constant 0 : i32
    %2 = arith.cmpi ne, %1, %c0_i32_0 : i32
    scf.if %2 {
      %cst_13 = arith.constant 0.000000e+00 : f32
      %17 = vector.broadcast %cst_13 : f32 to vector<8x128xf32>
      %c0_14 = arith.constant 0 : index
      %c0_15 = arith.constant 0 : index
      %18 = vector.load %arg4[%c0_14, %c0_15] : memref<8x128xf32, #tpu.memory_space<vmem>>, vector<8x128xf32>
      tpu.vector_store %arg4[%c0_14, %c0_15], %17 {strides = array<i32>} : memref<8x128xf32, #tpu.memory_space<vmem>>, vector<8x128xf32>,
      %cst_16 = arith.constant 0.000000e+00 : f32
      %19 = vector.broadcast %cst_16 : f32 to vector<8x128xf32>
      %c0_17 = arith.constant 0 : index
      %c0_18 = arith.constant 0 : index
      %20 = vector.load %arg5[%c0_17, %c0_18] : memref<8x128xf32, #tpu.memory_space<vmem>>, vector<8x128xf32>
      tpu.vector_store %arg5[%c0_17, %c0_18], %19 {strides = array<i32>} : memref<8x128xf32, #tpu.memory_space<vmem>>, vector<8x128xf32>,
    } else {
    }
    %c0 = arith.constant 0 : index
    %c0_1 = arith.constant 0 : index
    %3 = vector.load %arg2[%c0, %c0_1] : memref<16x128xf32, #tpu.memory_space<vmem>>, vector<16x128xf32>
    %c0_2 = arith.constant 0 : index
    %c0_3 = arith.constant 0 : index
    %4 = vector.load %arg3[%c0_2, %c0_3] : memref<16x128xf32, #tpu.memory_space<vmem>>, vector<16x128xf32>
    %c0_4 = arith.constant 0 : index
    %c0_5 = arith.constant 0 : index
    %5 = vector.load %arg4[%c0_4, %c0_5] : memref<8x128xf32, #tpu.memory_space<vmem>>, vector<8x128xf32>
    %6 = arith.mulf %3, %4 : vector<16x128xf32>
    %7 = vector.shape_cast %6 : vector<16x128xf32> to vector<2x8x128xf32>
    %cst = arith.constant dense<0.000000e+00> : vector<8x128xf32>
    %8 = vector.multi_reduction <add>, %7, %cst [0] : vector<2x8x128xf32> to vector<8x128xf32>
    %9 = arith.addf %5, %8 : vector<8x128xf32>
    %c0_6 = arith.constant 0 : index
    %c0_7 = arith.constant 0 : index
    %10 = vector.load %arg4[%c0_6, %c0_7] : memref<8x128xf32, #tpu.memory_space<vmem>>, vector<8x128xf32>
    tpu.vector_store %arg4[%c0_6, %c0_7], %9 {strides = array<i32>} : memref<8x128xf32, #tpu.memory_space<vmem>>, vector<8x128xf32>,
    %c0_8 = arith.constant 0 : index
    %c0_9 = arith.constant 0 : index
    %11 = vector.load %arg5[%c0_8, %c0_9] : memref<8x128xf32, #tpu.memory_space<vmem>>, vector<8x128xf32>
    %12 = arith.addf %3, %4 : vector<16x128xf32>
    %13 = vector.shape_cast %12 : vector<16x128xf32> to vector<2x8x128xf32>
    %cst_10 = arith.constant dense<0.000000e+00> : vector<8x128xf32>
    %14 = vector.multi_reduction <add>, %13, %cst_10 [0] : vector<2x8x128xf32> to vector<8x128xf32>
    %15 = arith.addf %11, %14 : vector<8x128xf32>
    %c0_11 = arith.constant 0 : index
    %c0_12 = arith.constant 0 : index
    %16 = vector.load %arg5[%c0_11, %c0_12] : memref<8x128xf32, #tpu.memory_space<vmem>>, vector<8x128xf32>
    tpu.vector_store %arg5[%c0_11, %c0_12], %15 {strides = array<i32>} : memref<8x128xf32, #tpu.memory_space<vmem>>, vector<8x128xf32>,
    return
  }
  func.func @transform_0(%arg0: i32, %arg1: i32) -> (i32, i32) {
    %c1_i32 = arith.constant 1 : i32
    %0 = arith.muli %arg0, %c1_i32 : i32
    %1 = arith.addi %0, %arg1 : i32
    %c0_i32 = arith.constant 0 : i32
    %2 = arith.minsi %1, %c0_i32 : i32
    %c0_i32_0 = arith.constant 0 : i32
    %c0_i32_1 = arith.constant 0 : i32
    return %2, %c0_i32_0 : i32, i32
  }
  func.func @transform_1(%arg0: i32, %arg1: i32) -> (i32, i32) {
    %c1_i32 = arith.constant 1 : i32
    %0 = arith.muli %arg0, %c1_i32 : i32
    %1 = arith.addi %0, %arg1 : i32
    %c0_i32 = arith.constant 0 : i32
    %2 = arith.minsi %1, %c0_i32 : i32
    %c0_i32_0 = arith.constant 0 : i32
    %c0_i32_1 = arith.constant 0 : i32
    return %2, %c0_i32_0 : i32, i32
  }
  func.func @transform_2(%arg0: i32, %arg1: i32) -> (i32, i32) {
    %c0_i32 = arith.constant 0 : i32
    %c0_i32_0 = arith.constant 0 : i32
    return %arg0, %c0_i32 : i32, i32
  }
  func.func @transform_3(%arg0: i32, %arg1: i32) -> (i32, i32) {
    %c0_i32 = arith.constant 0 : i32
    %c0_i32_0 = arith.constant 0 : i32
    return %arg0, %c0_i32 : i32, i32
  }
}

</mosaic_0001>

<llo_original>
// kernel: tpu_custom_call.1
$region0: #{tpu_custom_call.1}
  #allocation0 [shape = 'u32[]', space=smem, size = 0x4, offset = 0x4, fixed_abs, tag = 'smem constant byte address 0x4 - core index']
  #allocation1 [shape = 'u32[72,128]{1,0:T(1,128)}', space=vmem, size = 0x9000, scoped, tag = 'internal scratch']
  %s0 = inlined_call_operand.hbm [shape: f32[16,128], index: 0, kind: input, shape index: {}]
  %s1 = inlined_call_operand.hbm [shape: f32[16,128], index: 1, kind: input, shape index: {}]
  %s2 = inlined_call_operand.hbm [shape: f32[8,128], index: 2, kind: output, shape index: {0}]
  %s3 = inlined_call_operand.hbm [shape: f32[8,128], index: 3, kind: output, shape index: {1}]
  %4 = xla_tuple %s2, %s3
  %s5 = sld [smem:[#allocation0]]
  $region38: #{tpu_custom_call.1} parent=0
    _
  %s7 = ssub.s32 1, %s5
  %s8 = scalar_select 0, %s7, %s5
  $region1: #{tpu_custom_call.1} parent=0
    #allocation2 [shape = 'u8[8192]{0}', space=vmem, size = 0x2000, scoped, tag = 'input window, operand 0, single buffered']
    #allocation3 [shape = 's32[1]{0}', space=sflag, size = 0x4, scoped, tag = 'scoped memory for tpu_custom_call.1']
    #allocation4 [shape = 's32[1]{0}', space=sflag, size = 0x4, scoped, tag = 'scoped memory for tpu_custom_call.1']
    #allocation5 [shape = 'u8[8192]{0}', space=vmem, size = 0x2000, scoped, tag = 'input window, operand 1, single buffered']
    #allocation6 [shape = 's32[1]{0}', space=sflag, size = 0x4, scoped, tag = 'scoped memory for tpu_custom_call.1']
    #allocation7 [shape = 'u8[4096]{0}', space=vmem, size = 0x1000, scoped, tag = 'output window, operand 0, single buffered']
    #allocation8 [shape = 'u8[4096]{0}', space=vmem, size = 0x1000, scoped, tag = 'output window, operand 1, single buffered']
    #allocation9 [shape = 's32[1]{0}', space=sflag, size = 0x4, scoped, tag = 'scoped memory for tpu_custom_call.1']
    %9 = vsyncpa [#allocation3], 0
    %10 = vsyncpa [#allocation6], 0
    %11 = vsyncpa [#allocation4], 0
    %12 = vsyncpa [#allocation9], 0
    // Predicated region
    $region2: #{tpu_custom_call.1} parent=1 // pred_check
      _
    $region3: #{tpu_custom_call.1} parent=1 // pred_check_branch
      %14 = sbr.rel (0) target = $region5
    $region4: #{tpu_custom_call.1} parent=1 // pred_region
      %s15 = sadd.s32 0, 0
      %p16 = scmp.lt.s32.totalorder %s15, 0
      %s17 = scalar_select %p16, %s15, 0
      %s18 = smul.u32 2, %s17
      %20 = vsyncadd [#allocation3], 0
      %s21 = smul.addr %s18, 8
      %s22 = scalar_lea.hbm %s0, %s21
      %s23 = sshll.u32 %s22, 4
      %s24 = int_to_ptr.hbm [resolvable:$true] %s23
      %s25 = sshll.u32 [#allocation2], 4
      %s26 = int_to_ptr.vmem [resolvable:$true] %s25
      %31 = dma.hbm_to_vmem [thread:$0]  %s24, 256, %s26, [#allocation3], 128, 128, 8
    $region5: #{tpu_custom_call.1} parent=1 // pred_fallthru
      _
    // Predicated region
    $region6: #{tpu_custom_call.1} parent=1 // pred_check
      _
    $region7: #{tpu_custom_call.1} parent=1 // pred_check_branch
      %33 = sbr.rel (0) target = $region9
    $region8: #{tpu_custom_call.1} parent=1 // pred_region
      %s34 = sadd.s32 0, 0
      %p35 = scmp.lt.s32.totalorder %s34, 0
      %s36 = scalar_select %p35, %s34, 0
      %s37 = smul.u32 2, %s36
      %39 = vsyncadd [#allocation6], 0
      %s40 = smul.addr %s37, 8
      %s41 = scalar_lea.hbm %s1, %s40
      %s42 = sshll.u32 %s41, 4
      %s43 = int_to_ptr.hbm [resolvable:$true] %s42
      %s44 = sshll.u32 [#allocation5], 4
      %s45 = int_to_ptr.vmem [resolvable:$true] %s44
      %50 = dma.hbm_to_vmem [thread:$0]  %s43, 256, %s45, [#allocation6], 128, 128, 8
    $region9: #{tpu_custom_call.1} parent=1 // pred_fallthru
      _
    // Predicated region
    $region10: #{tpu_custom_call.1} parent=1 // pred_check
      _
    $region11: #{tpu_custom_call.1} parent=1 // pred_check_branch
      %52 = sbr.rel (0) target = $region13
    $region12: #{tpu_custom_call.1} parent=1 // pred_region
      %54 = dma.done [#allocation3], 256
    $region13: #{tpu_custom_call.1} parent=1 // pred_fallthru
      _
    // Predicated region
    $region14: #{tpu_custom_call.1} parent=1 // pred_check
      _
    $region15: #{tpu_custom_call.1} parent=1 // pred_check_branch
      %56 = sbr.rel (0) target = $region17
    $region16: #{tpu_custom_call.1} parent=1 // pred_region
      %58 = dma.done [#allocation6], 256
    $region17: #{tpu_custom_call.1} parent=1 // pred_fallthru
      _
    %s59 = sadd.s32 0, 0
    %p60 = scmp.lt.s32.totalorder %s59, 0
    %s61 = scalar_select %p60, %s59, 0
    %s62 = smul.u32 2, %s61
    %s63 = sadd.s32 0, 0
    %p64 = scmp.lt.s32.totalorder %s63, 0
    %s65 = scalar_select %p64, %s63, 0
    %s66 = smul.u32 2, %s65
    %p67 = scmp.eq.s32.totalorder 0, 0
    // Predicated region
    $region18: #{tpu_custom_call.1} parent=1 // pred_check
      %p68 = pneg %p67
    $region19: #{tpu_custom_call.1} parent=1 // pred_check_branch
      %70 = sbr.rel (%p68) target = $region21
    $region20: #{tpu_custom_call.1} parent=1 // pred_region
      %71 = vst [vmem:[#allocation7] sm:$0xff] 0.0
      %72 = vst [vmem:[#allocation8] sm:$0xff] 0.0
    $region21: #{tpu_custom_call.1} parent=1 // pred_fallthru
      _
    %v73 = vld [vmem:[#allocation2] sm:$0xff]
    %v74 = vld [vmem:[#allocation2 + $0x8] sm:$0xff]
    %v75 = vld [vmem:[#allocation5] sm:$0xff]
    %v76 = vld [vmem:[#allocation5 + $0x8] sm:$0xff]
    %v77 = vld [vmem:[#allocation7] sm:$0xff]
    %v78 = vmul.f32 %v73, %v75
    %v79 = vmul.f32 %v74, %v76
    %v80 = vadd.f32 %v78, %v79
    %v81 = vadd.f32 %v77, %v80
    %82 = vst [vmem:[#allocation7] sm:$0xff] %v81
    %v83 = vld [vmem:[#allocation8] sm:$0xff]
    %v84 = vadd.f32 %v73, %v75
    %v85 = vadd.f32 %v74, %v76
    %v86 = vadd.f32 %v84, %v85
    %v87 = vadd.f32 %v83, %v86
    %88 = vst [vmem:[#allocation8] sm:$0xff] %v87
    // Predicated region
    $region22: #{tpu_custom_call.1} parent=1 // pred_check
      _
    $region23: #{tpu_custom_call.1} parent=1 // pred_check_branch
      %90 = sbr.rel (0) target = $region25
    $region24: #{tpu_custom_call.1} parent=1 // pred_region
      %92 = vsyncadd [#allocation4], 0
      %s94 = sshll.u32 [#allocation7], 4
      %s95 = int_to_ptr.vmem [resolvable:$true] %s94
      %s96 = sshll.u32 %s2, 4
      %s97 = int_to_ptr.hbm [resolvable:$true] %s96
      %99 = dma.vmem_to_hbm [thread:$0]  %s95, 128, %s97, [#allocation4]
    $region25: #{tpu_custom_call.1} parent=1 // pred_fallthru
      _
    // Predicated region
    $region26: #{tpu_custom_call.1} parent=1 // pred_check
      _
    $region27: #{tpu_custom_call.1} parent=1 // pred_check_branch
      %101 = sbr.rel (0) target = $region29
    $region28: #{tpu_custom_call.1} parent=1 // pred_region
      %103 = vsyncadd [#allocation9], 0
      %s105 = sshll.u32 [#allocation8], 4
      %s106 = int_to_ptr.vmem [resolvable:$true] %s105
      %s107 = sshll.u32 %s3, 4
      %s108 = int_to_ptr.hbm [resolvable:$true] %s107
      %110 = dma.vmem_to_hbm [thread:$0]  %s106, 128, %s108, [#allocation9]
    $region29: #{tpu_custom_call.1} parent=1 // pred_fallthru
      _
    // Predicated region
    $region30: #{tpu_custom_call.1} parent=1 // pred_check
      _
    $region31: #{tpu_custom_call.1} parent=1 // pred_check_branch
      %112 = sbr.rel (0) target = $region33
    $region32: #{tpu_custom_call.1} parent=1 // pred_region
      %114 = dma.done [#allocation4], 128
    $region33: #{tpu_custom_call.1} parent=1 // pred_fallthru
      _
    // Predicated region
    $region34: #{tpu_custom_call.1} parent=1 // pred_check
      _
    $region35: #{tpu_custom_call.1} parent=1 // pred_check_branch
      %116 = sbr.rel (0) target = $region37
    $region36: #{tpu_custom_call.1} parent=1 // pred_region
      %118 = dma.done [#allocation9], 128
    $region37: #{tpu_custom_call.1} parent=1 // pred_fallthru
      _
    %119 = vsyncpa [#allocation3], 1
    %120 = vsyncpa [#allocation6], 1
    %121 = vsyncpa [#allocation4], 1
    %122 = vsyncpa [#allocation9], 1

</llo_original>
